<compile_context>
chip_gen: v7x
topology: tpu7x:2x2x1
jax: 0.10.0
libtpu: 0.0.40
codegen_flags: <defaults>
</compile_context>

<pallas_src>
import functools

import jax
import jax.numpy as jnp
from jax.experimental import pallas as pl
from jax.experimental.pallas import tpu as pltpu


# ------------------------------ small helpers -------------------------------

def _round_up(n, m=128):
    return ((n + m - 1) // m) * m


def _pad_lanes(a, m=128):
    """Pad the last (lane) axis up to a multiple of m with zeros (done once)."""
    pad = _round_up(a.shape[-1], m) - a.shape[-1]
    if pad == 0:
        return a
    return jnp.pad(a, [(0, 0)] * (a.ndim - 1) + [(0, pad)])


def _pad_rows(a, m=8):
    """Pad the leading (sublane) axis up to a multiple of m (shape-static, cheap)."""
    pad = (-a.shape[0]) % m
    if pad == 0:
        return a
    return jnp.pad(a, [(0, pad)] + [(0, 0)] * (a.ndim - 1))


def _as_f32(x):
    # mirror .float() without emitting a no-op cast when already f32
    return x if x.dtype == jnp.float32 else x.astype(jnp.float32)


# ----------------------------- Pallas kernels -------------------------------

def _encoder_kernel(x_ref, we_ref, be_ref, shared_ref):
    # shared = x @ We + be   (MXU matmul, f32 accumulate; lane-dense 128 store)
    shared_ref[...] = (
        jnp.dot(x_ref[...], we_ref[...], preferred_element_type=jnp.float32)
        + be_ref[...]
    )


def _fused_aux_kernel(x_ref, aux_ref, we_ref, be_ref, wdt_ref, wdb_ref, bd_ref,
                      shared_ref, dec_ref):
    # Fused encoder + decoder.  The concat(ss_rep, aux) of the reference module
    # is realized as split-K: shared @ Wd_top + aux @ Wd_bot.
    shared = (
        jnp.dot(x_ref[...], we_ref[...], preferred_element_type=jnp.float32)
        + be_ref[...]
    )
    shared_ref[...] = shared
    dec_ref[...] = (
        jnp.dot(shared, wdt_ref[...], preferred_element_type=jnp.float32)
        + jnp.dot(aux_ref[...], wdb_ref[...], preferred_element_type=jnp.float32)
        + bd_ref[...]
    )


def _fused_noaux_kernel(x_ref, we_ref, be_ref, wdt_ref, bd_ref,
                        shared_ref, dec_ref):
    # Fused encoder + decoder when inputs[1] is empty (decoder acts on shared).
    shared = (
        jnp.dot(x_ref[...], we_ref[...], preferred_element_type=jnp.float32)
        + be_ref[...]
    )
    shared_ref[...] = shared
    dec_ref[...] = (
        jnp.dot(shared, wdt_ref[...], preferred_element_type=jnp.float32)
        + bd_ref[...]
    )


# ------------------------------ jitted wrappers ------------------------------

_COMPILER_PARAMS = pltpu.CompilerParams(dimension_semantics=("arbitrary",))


@functools.partial(jax.jit, static_argnames=("d_hid",))
def encoder_forward(x, we_p, be_p, *, d_hid):
    """shared = x @ We + be, single full-block pallas_call, lane/sublane-dense."""
    B = x.shape[0]
    xp = _pad_rows(x)                       # sublane-dense (no-op if B % 8 == 0)
    Bp, Din = xp.shape
    HP = we_p.shape[1]
    shared_p = pl.pallas_call(
        _encoder_kernel,
        out_shape=jax.ShapeDtypeStruct((Bp, HP), jnp.float32),
        grid=(1,),
        in_specs=[
            pl.BlockSpec((Bp, Din), lambda i: (0, 0)),
            pl.BlockSpec((Din, HP), lambda i: (0, 0)),
            pl.BlockSpec((1, HP), lambda i: (0, 0)),
        ],
        out_specs=pl.BlockSpec((Bp, HP), lambda i: (0, 0)),
        compiler_params=_COMPILER_PARAMS,
    )(xp, we_p, be_p)
    return shared_p[:B, :d_hid]


@functools.partial(jax.jit, static_argnames=("d_hid", "d_out"))
def fused_encode_decode_aux(x, aux, we_p, be_p, wdt_p, wdb_p, bd_p, *,
                            d_hid, d_out):
    """One pallas_call: shared = x@We+be ; dec = shared@Wdt + aux@Wdb + bd."""
    B = x.shape[0]
    xp = _pad_rows(x)
    auxp = _pad_rows(aux)
    Bp, Din = xp.shape
    Daux = auxp.shape[1]
    HP = we_p.shape[1]
    OP = wdt_p.shape[1]
    shared_p, dec_p = pl.pallas_call(
        _fused_aux_kernel,
        out_shape=(jax.ShapeDtypeStruct((Bp, HP), jnp.float32),
                   jax.ShapeDtypeStruct((Bp, OP), jnp.float32)),
        grid=(1,),
        in_specs=[
            pl.BlockSpec((Bp, Din), lambda i: (0, 0)),
            pl.BlockSpec((Bp, Daux), lambda i: (0, 0)),
            pl.BlockSpec((Din, HP), lambda i: (0, 0)),
            pl.BlockSpec((1, HP), lambda i: (0, 0)),
            pl.BlockSpec((HP, OP), lambda i: (0, 0)),
            pl.BlockSpec((Daux, OP), lambda i: (0, 0)),
            pl.BlockSpec((1, OP), lambda i: (0, 0)),
        ],
        out_specs=(pl.BlockSpec((Bp, HP), lambda i: (0, 0)),
                   pl.BlockSpec((Bp, OP), lambda i: (0, 0))),
        compiler_params=_COMPILER_PARAMS,
    )(xp, auxp, we_p, be_p, wdt_p, wdb_p, bd_p)
    return shared_p[:B, :d_hid], dec_p[:B, :d_out]


@functools.partial(jax.jit, static_argnames=("d_hid", "d_out"))
def fused_encode_decode_noaux(x, we_p, be_p, wdt_p, bd_p, *, d_hid, d_out):
    B = x.shape[0]
    xp = _pad_rows(x)
    Bp, Din = xp.shape
    HP = we_p.shape[1]
    OP = wdt_p.shape[1]
    shared_p, dec_p = pl.pallas_call(
        _fused_noaux_kernel,
        out_shape=(jax.ShapeDtypeStruct((Bp, HP), jnp.float32),
                   jax.ShapeDtypeStruct((Bp, OP), jnp.float32)),
        grid=(1,),
        in_specs=[
            pl.BlockSpec((Bp, Din), lambda i: (0, 0)),
            pl.BlockSpec((Din, HP), lambda i: (0, 0)),
            pl.BlockSpec((1, HP), lambda i: (0, 0)),
            pl.BlockSpec((HP, OP), lambda i: (0, 0)),
            pl.BlockSpec((1, OP), lambda i: (0, 0)),
        ],
        out_specs=(pl.BlockSpec((Bp, HP), lambda i: (0, 0)),
                   pl.BlockSpec((Bp, OP), lambda i: (0, 0))),
        compiler_params=_COMPILER_PARAMS,
    )(xp, we_p, be_p, wdt_p, bd_p)
    return shared_p[:B, :d_hid], dec_p[:B, :d_out]


# ------------------------- Encoder / Decoder modules -------------------------

class LinearModule:
    """Minimal stand-in for an nn.Linear-based encoder/decoder."""

    def __init__(self, key, in_features, out_features):
        kw, kb = jax.random.split(key)
        scale = 1.0 / jnp.sqrt(jnp.float32(in_features))
        self.w = jax.random.uniform(
            kw, (in_features, out_features), jnp.float32, -scale, scale
        )
        self.b = jax.random.uniform(
            kb, (out_features,), jnp.float32, -scale, scale
        )
        self.in_features = in_features
        self.out_features = out_features
        # Hoisted (one-time) lane padding so kernel output stores are unmasked.
        self.w_pad = _pad_lanes(self.w)
        self.b_pad = _pad_lanes(self.b.reshape(1, -1))

    def __call__(self, x):
        return encoder_forward(_as_f32(x), self.w_pad, self.b_pad,
                               d_hid=self.out_features)


# ------------------------------ AbsArchitecture ------------------------------

class AbsArchitecture:
    """JAX port of LibMTL AbsArchitecture with a fused Pallas hot path."""

    def __init__(self, task_name, encoder_class, decoders, rep_grad,
                 multi_input, device=None, **kwargs):
        self.task_name = task_name
        self.task_num = len(task_name)
        self.encoder = encoder_class
        self.decoders = decoders
        self.rep_grad = rep_grad
        self.multi_input = multi_input
        self.device = device
        self.kwargs = kwargs
        if self.rep_grad:
            self.rep_tasks = {}
            self.rep = {}
        # cache of padded, split decoder weights keyed by (task, rep_dim)
        self._dec_split_cache = {}

    # --- parameter plumbing (one-time, hoisted out of the hot path) ---------

    def _decoder_split(self, task, rep_dim):
        key = (task, int(rep_dim))
        if key not in self._dec_split_cache:
            dec = self.decoders[task]
            w, b = dec.w, dec.b
            d_out = w.shape[1]
            HP = _round_up(rep_dim)
            OP = _round_up(d_out)
            wdt = jnp.zeros((HP, OP), jnp.float32)
            wdt = wdt.at[:min(rep_dim, w.shape[0]), :d_out].set(w[:rep_dim])
            bd = jnp.zeros((1, OP), jnp.float32).at[:, :d_out].set(
                b.reshape(1, -1))
            if w.shape[0] > rep_dim:
                wdb = jnp.zeros((w.shape[0] - rep_dim, OP), jnp.float32)
                wdb = wdb.at[:, :d_out].set(w[rep_dim:])
            else:
                wdb = None
            self._dec_split_cache[key] = (wdt, wdb, bd, d_out)
        return self._dec_split_cache[key]

    # --- rep_grad bookkeeping -------------------------------------------------

    def _prepare_rep(self, rep, task, same_rep=None):
        if self.rep_grad:
            if not same_rep:
                self.rep[task] = rep
            else:
                self.rep = rep
            # detach().clone() has identical forward-pass value; JAX arrays are
            # immutable so storing the stop_gradient'ed array is equivalent.
            # TODO(synk): requires_grad bookkeeping has no JAX equivalent (grad
            # wiring is external via jax.grad); forward values are unaffected.
            self.rep_tasks[task] = jax.lax.stop_gradient(rep)
            return self.rep_tasks[task]
        else:
            return rep

    # --- forward ----------------------------------------------------------------

    def forward(self, inputs, task_name=None):
        first_outputs = list()
        same_rep = True if not isinstance(inputs[0], list) and (not self.multi_input) else False
        out = {}
        dec_cache = {}
        cached_shared = None
        enc = self.encoder
        d_hid = enc.out_features

        for tn, task in enumerate(self.task_name):
            if task_name is not None and task != task_name:
                continue
            ss_rep = inputs[0][tn] if isinstance(inputs[0], list) else inputs[0]
            ss_rep = self._prepare_rep(ss_rep, task, same_rep)
            ss_rep = _as_f32(ss_rep)

            if task_name == task:
                # Fused encoder+decoder in ONE pallas_call (concat -> split-K).
                wdt, wdb, bd, d_out = self._decoder_split(task, d_hid)
                aux = inputs[1]
                if aux.size != 0:
                    shared, dec = fused_encode_decode_aux(
                        ss_rep, _as_f32(aux), enc.w_pad, enc.b_pad,
                        wdt, wdb, bd, d_hid=d_hid, d_out=d_out)
                else:
                    shared, dec = fused_encode_decode_noaux(
                        ss_rep, enc.w_pad, enc.b_pad, wdt, bd,
                        d_hid=d_hid, d_out=d_out)
                dec_cache[task] = dec
            else:
                # Encoder-only path (task_name=None). When the representation is
                # shared, compute it once and reuse (identical forward values).
                if same_rep and cached_shared is not None:
                    shared = cached_shared
                else:
                    shared = encoder_forward(ss_rep, enc.w_pad, enc.b_pad,
                                             d_hid=d_hid)
                    if same_rep:
                        cached_shared = shared

            out[task] = shared
            first_outputs.append(shared)

        out2 = {}
        for tn, task in enumerate(self.task_name):
            if task_name == task:
                ss_rep = first_outputs[0] if isinstance(first_outputs, list) else first_outputs
                # preserve rep_grad bookkeeping of the reference second loop;
                # the decoder output itself was already produced by the fused kernel.
                self._prepare_rep(ss_rep, task, same_rep)
                out2[task] = dec_cache[task]
        return (out2, out)

    __call__ = forward

    def get_share_params(self):
        return (self.encoder.w, self.encoder.b)

    def zero_grad_share_params(self):
        pass  # no-op: JAX gradients are functional, nothing to zero.


# ----------------------------------- main -----------------------------------

if __name__ == "__main__":
    key = jax.random.PRNGKey(0)
    k_x, k_aux, k_enc, k_d1, k_d2 = jax.random.split(key, 5)

    # small, forward-implied shapes
    B = 8          # batch
    D_IN = 32      # encoder input features
    D_HID = 32     # shared representation features
    D_AUX = 16     # extra features concatenated before decoding (inputs[1])
    D_OUT = 4      # per-task decoder output

    task_names = ["segmentation", "depth"]

    encoder = LinearModule(k_enc, D_IN, D_HID)
    decoders = {
        "segmentation": LinearModule(k_d1, D_HID + D_AUX, D_OUT),
        "depth": LinearModule(k_d2, D_HID + D_AUX, D_OUT),
    }

    model = AbsArchitecture(
        task_name=task_names,
        encoder_class=encoder,
        decoders=decoders,
        rep_grad=False,
        multi_input=False,
        device=None,
    )

    x = jax.random.normal(k_x, (B, D_IN), jnp.float32)
    aux = jax.random.normal(k_aux, (B, D_AUX), jnp.float32)
    inputs = (x, aux)

    # Exercise both phases: fused encoder+decoder for the selected task.
    out2, out = model(inputs, task_name="segmentation")
    jax.block_until_ready(out2["segmentation"])
    jax.block_until_ready(out["segmentation"])

    # Also the task_name=None path (encoder once, reused for all tasks; empty out2).
    out2_none, out_none = model(inputs, task_name=None)
    for t in task_names:
        jax.block_until_ready(out_none[t])
    assert out2_none == {}

    # Numerical check against a pure-jnp reference.
    hi = jax.lax.Precision.HIGHEST
    ref_shared = jnp.dot(x, encoder.w, precision=hi) + encoder.b
    ref_dec = (
        jnp.dot(jnp.concatenate((ref_shared, aux), axis=1),
                decoders["segmentation"].w, precision=hi)
        + decoders["segmentation"].b
    )
    assert out["segmentation"].shape == (B, D_HID)
    assert out2["segmentation"].shape == (B, D_OUT)
    assert jnp.allclose(out["segmentation"], ref_shared, atol=1e-4, rtol=1e-4)
    assert jnp.allclose(out2["segmentation"], ref_dec, atol=1e-4, rtol=1e-4)
    assert jnp.allclose(out_none["segmentation"], ref_shared, atol=1e-4, rtol=1e-4)
    assert jnp.allclose(out_none["depth"], ref_shared, atol=1e-4, rtol=1e-4)

    # Extra check: odd batch size exercises the sublane-padding path.
    x5 = x[:5]
    aux5 = aux[:5]
    out2_5, out_5 = model((x5, aux5), task_name="depth")
    jax.block_until_ready(out2_5["depth"])
    ref_shared5 = jnp.dot(x5, encoder.w, precision=hi) + encoder.b
    ref_dec5 = (
        jnp.dot(jnp.concatenate((ref_shared5, aux5), axis=1),
                decoders["depth"].w, precision=hi)
        + decoders["depth"].b
    )
    assert out_5["depth"].shape == (5, D_HID)
    assert out2_5["depth"].shape == (5, D_OUT)
    assert jnp.allclose(out_5["depth"], ref_shared5, atol=1e-4, rtol=1e-4)
    assert jnp.allclose(out2_5["depth"], ref_dec5, atol=1e-4, rtol=1e-4)

    print("KERNEL_OK")
</pallas_src>

<mosaic_0001>
module attributes {stable_mosaic.version = 11 : i64} {
  func.func @_fused_aux_kernel(%arg0: i32, %arg1: memref<8x32xf32, #tpu.memory_space<vmem>>, %arg2: memref<8x16xf32, #tpu.memory_space<vmem>>, %arg3: memref<32x128xf32, #tpu.memory_space<vmem>>, %arg4: memref<1x128xf32, #tpu.memory_space<vmem>>, %arg5: memref<128x128xf32, #tpu.memory_space<vmem>>, %arg6: memref<16x128xf32, #tpu.memory_space<vmem>>, %arg7: memref<1x128xf32, #tpu.memory_space<vmem>>, %arg8: memref<8x128xf32, #tpu.memory_space<vmem>>, %arg9: memref<8x128xf32, #tpu.memory_space<vmem>>) attributes {dimension_semantics = [#tpu.dimension_semantics<arbitrary>], iteration_bounds = array<i64: 1>, scalar_prefetch = 0 : i64, scratch_operands = 0 : i64, tpu.core_type = #tpu.core_type<tc>, window_params = [{pipeline_mode = #tpu.pipeline_mode<synchronous>, transform_indices = @transform_0, window_bounds = array<i64: 8, 32>}, {pipeline_mode = #tpu.pipeline_mode<synchronous>, transform_indices = @transform_1, window_bounds = array<i64: 8, 16>}, {pipeline_mode = #tpu.pipeline_mode<synchronous>, transform_indices = @transform_2, window_bounds = array<i64: 32, 128>}, {pipeline_mode = #tpu.pipeline_mode<synchronous>, transform_indices = @transform_3, window_bounds = array<i64: 1, 128>}, {pipeline_mode = #tpu.pipeline_mode<synchronous>, transform_indices = @transform_4, window_bounds = array<i64: 128, 128>}, {pipeline_mode = #tpu.pipeline_mode<synchronous>, transform_indices = @transform_5, window_bounds = array<i64: 16, 128>}, {pipeline_mode = #tpu.pipeline_mode<synchronous>, transform_indices = @transform_6, window_bounds = array<i64: 1, 128>}, {pipeline_mode = #tpu.pipeline_mode<synchronous>, transform_indices = @transform_7, window_bounds = array<i64: 8, 128>}, {pipeline_mode = #tpu.pipeline_mode<synchronous>, transform_indices = @transform_8, window_bounds = array<i64: 8, 128>}]} {
    %c0 = arith.constant 0 : index
    %c0_0 = arith.constant 0 : index
    %0 = vector.load %arg1[%c0, %c0_0] : memref<8x32xf32, #tpu.memory_space<vmem>>, vector<8x32xf32>
    %c0_1 = arith.constant 0 : index
    %c0_2 = arith.constant 0 : index
    %1 = vector.load %arg3[%c0_1, %c0_2] : memref<32x128xf32, #tpu.memory_space<vmem>>, vector<32x128xf32>
    %cst = arith.constant dense<0.000000e+00> : vector<8x128xf32>
    %2 = tpu.matmul %0, %1, %cst {dimension_numbers = #tpu.dot_dimension_numbers<[1], [0], [0], [1], [0, 0, 1, 1], [], []>} : vector<8x32xf32>, vector<32x128xf32>, vector<8x128xf32> -> vector<8x128xf32>
    %c0_3 = arith.constant 0 : index
    %c0_4 = arith.constant 0 : index
    %3 = vector.load %arg4[%c0_3, %c0_4] : memref<1x128xf32, #tpu.memory_space<vmem>>, vector<1x128xf32>
    %4 = vector.broadcast %3 : vector<1x128xf32> to vector<8x128xf32>
    %5 = arith.addf %2, %4 : vector<8x128xf32>
    %c0_5 = arith.constant 0 : index
    %c0_6 = arith.constant 0 : index
    %6 = vector.load %arg8[%c0_5, %c0_6] : memref<8x128xf32, #tpu.memory_space<vmem>>, vector<8x128xf32>
    tpu.vector_store %arg8[%c0_5, %c0_6], %5 {strides = array<i32>} : memref<8x128xf32, #tpu.memory_space<vmem>>, vector<8x128xf32>,
    %c0_7 = arith.constant 0 : index
    %c0_8 = arith.constant 0 : index
    %7 = vector.load %arg5[%c0_7, %c0_8] : memref<128x128xf32, #tpu.memory_space<vmem>>, vector<128x128xf32>
    %cst_9 = arith.constant dense<0.000000e+00> : vector<8x128xf32>
    %8 = tpu.matmul %5, %7, %cst_9 {dimension_numbers = #tpu.dot_dimension_numbers<[1], [0], [0], [1], [0, 0, 1, 1], [], []>} : vector<8x128xf32>, vector<128x128xf32>, vector<8x128xf32> -> vector<8x128xf32>
    %c0_10 = arith.constant 0 : index
    %c0_11 = arith.constant 0 : index
    %9 = vector.load %arg2[%c0_10, %c0_11] : memref<8x16xf32, #tpu.memory_space<vmem>>, vector<8x16xf32>
    %c0_12 = arith.constant 0 : index
    %c0_13 = arith.constant 0 : index
    %10 = vector.load %arg6[%c0_12, %c0_13] : memref<16x128xf32, #tpu.memory_space<vmem>>, vector<16x128xf32>
    %cst_14 = arith.constant dense<0.000000e+00> : vector<8x128xf32>
    %11 = tpu.matmul %9, %10, %cst_14 {dimension_numbers = #tpu.dot_dimension_numbers<[1], [0], [0], [1], [0, 0, 1, 1], [], []>} : vector<8x16xf32>, vector<16x128xf32>, vector<8x128xf32> -> vector<8x128xf32>
    %12 = arith.addf %8, %11 : vector<8x128xf32>
    %c0_15 = arith.constant 0 : index
    %c0_16 = arith.constant 0 : index
    %13 = vector.load %arg7[%c0_15, %c0_16] : memref<1x128xf32, #tpu.memory_space<vmem>>, vector<1x128xf32>
    %14 = vector.broadcast %13 : vector<1x128xf32> to vector<8x128xf32>
    %15 = arith.addf %12, %14 : vector<8x128xf32>
    %c0_17 = arith.constant 0 : index
    %c0_18 = arith.constant 0 : index
    %16 = vector.load %arg9[%c0_17, %c0_18] : memref<8x128xf32, #tpu.memory_space<vmem>>, vector<8x128xf32>
    tpu.vector_store %arg9[%c0_17, %c0_18], %15 {strides = array<i32>} : memref<8x128xf32, #tpu.memory_space<vmem>>, vector<8x128xf32>,
    return
  }
  func.func @transform_0(%arg0: i32) -> (i32, i32) {
    %c0_i32 = arith.constant 0 : i32
    %c0_i32_0 = arith.constant 0 : i32
    %c0_i32_1 = arith.constant 0 : i32
    return %c0_i32, %c0_i32_0 : i32, i32
  }
  func.func @transform_1(%arg0: i32) -> (i32, i32) {
    %c0_i32 = arith.constant 0 : i32
    %c0_i32_0 = arith.constant 0 : i32
    %c0_i32_1 = arith.constant 0 : i32
    return %c0_i32, %c0_i32_0 : i32, i32
  }
  func.func @transform_2(%arg0: i32) -> (i32, i32) {
    %c0_i32 = arith.constant 0 : i32
    %c0_i32_0 = arith.constant 0 : i32
    %c0_i32_1 = arith.constant 0 : i32
    return %c0_i32, %c0_i32_0 : i32, i32
  }
  func.func @transform_3(%arg0: i32) -> (i32, i32) {
    %c0_i32 = arith.constant 0 : i32
    %c0_i32_0 = arith.constant 0 : i32
    %c0_i32_1 = arith.constant 0 : i32
    return %c0_i32, %c0_i32_0 : i32, i32
  }
  func.func @transform_4(%arg0: i32) -> (i32, i32) {
    %c0_i32 = arith.constant 0 : i32
    %c0_i32_0 = arith.constant 0 : i32
    %c0_i32_1 = arith.constant 0 : i32
    return %c0_i32, %c0_i32_0 : i32, i32
  }
  func.func @transform_5(%arg0: i32) -> (i32, i32) {
    %c0_i32 = arith.constant 0 : i32
    %c0_i32_0 = arith.constant 0 : i32
    %c0_i32_1 = arith.constant 0 : i32
    return %c0_i32, %c0_i32_0 : i32, i32
  }
  func.func @transform_6(%arg0: i32) -> (i32, i32) {
    %c0_i32 = arith.constant 0 : i32
    %c0_i32_0 = arith.constant 0 : i32
    %c0_i32_1 = arith.constant 0 : i32
    return %c0_i32, %c0_i32_0 : i32, i32
  }
  func.func @transform_7(%arg0: i32) -> (i32, i32) {
    %c0_i32 = arith.constant 0 : i32
    %c0_i32_0 = arith.constant 0 : i32
    %c0_i32_1 = arith.constant 0 : i32
    return %c0_i32, %c0_i32_0 : i32, i32
  }
  func.func @transform_8(%arg0: i32) -> (i32, i32) {
    %c0_i32 = arith.constant 0 : i32
    %c0_i32_0 = arith.constant 0 : i32
    %c0_i32_1 = arith.constant 0 : i32
    return %c0_i32, %c0_i32_0 : i32, i32
  }
}

</mosaic_0001>

<llo_original>
// kernel: fused_encode_decode_aux.1
$region0: #{fused_encode_decode_aux.1}
  #allocation0 [shape = 'u32[]', space=smem, size = 0x4, offset = 0x4, fixed_abs, tag = 'smem constant byte address 0x4 - core index']
  #allocation1 [shape = 'u32[144,128]{1,0:T(1,128)}', space=vmem, size = 0x12000, scoped, tag = 'internal scratch']
  %s0 = inlined_call_operand.hbm [shape: f32[8,32], index: 0, kind: input, shape index: {}]
  %s1 = inlined_call_operand.hbm [shape: f32[8,16], index: 1, kind: input, shape index: {}]
  %s2 = inlined_call_operand.hbm [shape: f32[32,128], index: 2, kind: input, shape index: {}]
  %s3 = inlined_call_operand.vmem [shape: f32[1,128], index: 3, kind: input, shape index: {}]
  %s4 = inlined_call_operand.hbm [shape: f32[128,128], index: 4, kind: input, shape index: {}]
  %s5 = inlined_call_operand.vmem [shape: f32[16,128], index: 5, kind: input, shape index: {}]
  %s6 = inlined_call_operand.vmem [shape: f32[1,128], index: 6, kind: input, shape index: {}]
  %s7 = inlined_call_operand.hbm [shape: f32[8,128], index: 7, kind: output, shape index: {0}]
  %s8 = inlined_call_operand.vmem [shape: f32[8,128], index: 8, kind: output, shape index: {1}]
  %9 = xla_tuple %s7, %s8
  %s10 = sld [smem:[#allocation0]]
  $region62: #{fused_encode_decode_aux.1} parent=0
    _
  %s12 = ssub.s32 1, %s10
  %s13 = scalar_select 0, %s12, %s10
  $region1: #{fused_encode_decode_aux.1} parent=0
    #allocation2 [shape = 'u8[4096]{0}', space=vmem, size = 0x1000, scoped, tag = 'input window, operand 0, single buffered']
    #allocation3 [shape = 's32[1]{0}', space=sflag, size = 0x4, scoped, tag = 'scoped memory for fused_encode_decode_aux.1']
    #allocation4 [shape = 's32[1]{0}', space=sflag, size = 0x4, scoped, tag = 'scoped memory for fused_encode_decode_aux.1']
    #allocation5 [shape = 'u8[4096]{0}', space=vmem, size = 0x1000, scoped, tag = 'input window, operand 1, single buffered']
    #allocation6 [shape = 's32[1]{0}', space=sflag, size = 0x4, scoped, tag = 'scoped memory for fused_encode_decode_aux.1']
    #allocation7 [shape = 'u8[16384]{0}', space=vmem, size = 0x4000, scoped, tag = 'input window, operand 2, single buffered']
    #allocation8 [shape = 'u8[65536]{0}', space=vmem, size = 0x10000, scoped, tag = 'input window, operand 4, single buffered']
    #allocation9 [shape = 's32[1]{0}', space=sflag, size = 0x4, scoped, tag = 'scoped memory for fused_encode_decode_aux.1']
    #allocation10 [shape = 'u8[4096]{0}', space=vmem, size = 0x1000, scoped, tag = 'output window, operand 0, single buffered']
    %14 = vsyncpa [#allocation3], 0
    %15 = vsyncpa [#allocation6], 0
    %16 = vsyncpa [#allocation9], 0
    %17 = vsyncpa [#allocation4], 0
    // Predicated region
    $region2: #{fused_encode_decode_aux.1} parent=1 // pred_check
      _
    $region3: #{fused_encode_decode_aux.1} parent=1 // pred_check_branch
      %19 = sbr.rel (0) target = $region5
    $region4: #{fused_encode_decode_aux.1} parent=1 // pred_region
      %s21 = ssub.s32 128, 128
      %22 = vsyncadd [#allocation3], %s21
      %s24 = sshll.u32 [#allocation2], 4
      %s25 = int_to_ptr.vmem [resolvable:$true] %s24
      %27 = dma.hbm_to_vmem [thread:$0]  %s0, 128, %s25, [#allocation3]
    $region5: #{fused_encode_decode_aux.1} parent=1 // pred_fallthru
      _
    // Predicated region
    $region6: #{fused_encode_decode_aux.1} parent=1 // pred_check
      _
    $region7: #{fused_encode_decode_aux.1} parent=1 // pred_check_branch
      %29 = sbr.rel (0) target = $region9
    $region8: #{fused_encode_decode_aux.1} parent=1 // pred_region
      %s31 = ssub.s32 128, 128
      %32 = vsyncadd [#allocation6], %s31
      %s34 = sshll.u32 [#allocation5], 4
      %s35 = int_to_ptr.vmem [resolvable:$true] %s34
      %37 = dma.hbm_to_vmem [thread:$0]  %s1, 128, %s35, [#allocation6]
    $region9: #{fused_encode_decode_aux.1} parent=1 // pred_fallthru
      _
    // Predicated region
    $region10: #{fused_encode_decode_aux.1} parent=1 // pred_check
      _
    $region11: #{fused_encode_decode_aux.1} parent=1 // pred_check_branch
      %39 = sbr.rel (0) target = $region13
    $region12: #{fused_encode_decode_aux.1} parent=1 // pred_region
      %s41 = ssub.s32 512, 512
      %42 = vsyncadd [#allocation6], %s41
      %s43 = sshll.u32 [#allocation7], 4
      %s44 = int_to_ptr.vmem [resolvable:$true] %s43
      %49 = dma.hbm_to_vmem [thread:$0]  %s2, 512, %s44, [#allocation6], 128, 128, 8
    $region13: #{fused_encode_decode_aux.1} parent=1 // pred_fallthru
      _
    // Predicated region
    $region14: #{fused_encode_decode_aux.1} parent=1 // pred_check
      _
    $region15: #{fused_encode_decode_aux.1} parent=1 // pred_check_branch
      %51 = sbr.rel (0) target = $region17
    $region16: #{fused_encode_decode_aux.1} parent=1 // pred_region
      _
    $region17: #{fused_encode_decode_aux.1} parent=1 // pred_fallthru
      _
    // Predicated region
    $region18: #{fused_encode_decode_aux.1} parent=1 // pred_check
      _
    $region19: #{fused_encode_decode_aux.1} parent=1 // pred_check_branch
      %53 = sbr.rel (0) target = $region21
    $region20: #{fused_encode_decode_aux.1} parent=1 // pred_region
      %s55 = ssub.s32 2048, 2048
      %56 = vsyncadd [#allocation9], %s55
      %s57 = sshll.u32 [#allocation8], 4
      %s58 = int_to_ptr.vmem [resolvable:$true] %s57
      %63 = dma.hbm_to_vmem [thread:$0]  %s4, 2048, %s58, [#allocation9], 128, 128, 8
    $region21: #{fused_encode_decode_aux.1} parent=1 // pred_fallthru
      _
    // Predicated region
    $region22: #{fused_encode_decode_aux.1} parent=1 // pred_check
      _
    $region23: #{fused_encode_decode_aux.1} parent=1 // pred_check_branch
      %65 = sbr.rel (0) target = $region25
    $region24: #{fused_encode_decode_aux.1} parent=1 // pred_region
      _
    $region25: #{fused_encode_decode_aux.1} parent=1 // pred_fallthru
      _
    // Predicated region
    $region26: #{fused_encode_decode_aux.1} parent=1 // pred_check
      _
    $region27: #{fused_encode_decode_aux.1} parent=1 // pred_check_branch
      %67 = sbr.rel (0) target = $region29
    $region28: #{fused_encode_decode_aux.1} parent=1 // pred_region
      _
    $region29: #{fused_encode_decode_aux.1} parent=1 // pred_fallthru
      _
    // Predicated region
    $region30: #{fused_encode_decode_aux.1} parent=1 // pred_check
      _
    $region31: #{fused_encode_decode_aux.1} parent=1 // pred_check_branch
      %69 = sbr.rel (0) target = $region33
    $region32: #{fused_encode_decode_aux.1} parent=1 // pred_region
      %70 = dma.done [#allocation3], 128
    $region33: #{fused_encode_decode_aux.1} parent=1 // pred_fallthru
      _
    // Predicated region
    $region34: #{fused_encode_decode_aux.1} parent=1 // pred_check
      _
    $region35: #{fused_encode_decode_aux.1} parent=1 // pred_check_branch
      %72 = sbr.rel (0) target = $region37
    $region36: #{fused_encode_decode_aux.1} parent=1 // pred_region
      %73 = dma.done [#allocation6], 128
    $region37: #{fused_encode_decode_aux.1} parent=1 // pred_fallthru
      _
    // Predicated region
    $region38: #{fused_encode_decode_aux.1} parent=1 // pred_check
      _
    $region39: #{fused_encode_decode_aux.1} parent=1 // pred_check_branch
      %75 = sbr.rel (0) target = $region41
    $region40: #{fused_encode_decode_aux.1} parent=1 // pred_region
      %76 = dma.done [#allocation6], 512
    $region41: #{fused_encode_decode_aux.1} parent=1 // pred_fallthru
      _
    // Predicated region
    $region42: #{fused_encode_decode_aux.1} parent=1 // pred_check
      _
    $region43: #{fused_encode_decode_aux.1} parent=1 // pred_check_branch
      %78 = sbr.rel (0) target = $region45
    $region44: #{fused_encode_decode_aux.1} parent=1 // pred_region
      %79 = dma.done [#allocation9], 2048
    $region45: #{fused_encode_decode_aux.1} parent=1 // pred_fallthru
      _
    %v80 = vld [vmem:[#allocation2] sm:$0xff]
    %v81 = vld [vmem:[#allocation7] sm:$0xff]
    %v82 = vld [vmem:[#allocation7 + $0x8] sm:$0xff]
    %v83 = vld [vmem:[#allocation7 + $0x10] sm:$0xff]
    %v84 = vld [vmem:[#allocation7 + $0x18] sm:$0xff]
    %v85 = vld [vmem:[%s3] sm:$0x1]
    %v87 = vlaneseq
    %v88 = vshrl.u32 %v87, 7
    %v89 = vsub.s32 0, %v88
    %v90 = vrot.slane %v85, %v89
    %vm92 = vcmask 261120
    %v94 = vsel %vm92, %v80, 0
    %96 = vmatprep.subr.mxu0 0.0
    %97 = vmatpush1.msra.mxu0 %v81
    %98 = vmatprep.subr.mxu0 0.0
    %99 = vmatpush1.msra.mxu0 %v82
    %100 = vmatprep.subr.mxu0 0.0
    %101 = vmatpush1.msra.mxu0 %v83
    %102 = vmatprep.subr.mxu0 0.0
    %103 = vmatpush1.msra.mxu0 %v84
    %104 = vmatprep.subr.mxu0 0.0
    %105 = vmatpush1.msra.mxu0 0.0
    %106 = vmatprep.subr.mxu0 0.0
    %107 = vmatpush1.msra.mxu0 0.0
    %108 = vmatprep.subr.mxu0 0.0
    %109 = vmatpush1.msra.mxu0 0.0
    %110 = vmatprep.subr.mxu0 0.0
    %111 = vmatpush1.msra.mxu0 0.0
    %112 = vmatprep.subr.mxu0 0.0
    %113 = vmatpush1.msra.mxu0 0.0
    %114 = vmatprep.subr.mxu0 0.0
    %115 = vmatpush1.msra.mxu0 0.0
    %116 = vmatprep.subr.mxu0 0.0
    %117 = vmatpush1.msra.mxu0 0.0
    %118 = vmatprep.subr.mxu0 0.0
    %119 = vmatpush1.msra.mxu0 0.0
    %120 = vmatprep.subr.mxu0 0.0
    %121 = vmatpush1.msra.mxu0 0.0
    %122 = vmatprep.subr.mxu0 0.0
    %123 = vmatpush1.msra.mxu0 0.0
    %124 = vmatprep.subr.mxu0 0.0
    %125 = vmatpush1.msra.mxu0 0.0
    %126 = vmatprep.subr.mxu0 0.0
    %127 = vmatpush1.msra.mxu0 0.0
    %128 = vmatprep.subr.mxu0 0.0
    %129 = vmatpush1.msra.mxu0 0.0
    %130 = vmatprep.subr.mxu0 0.0
    %131 = vmatpush1.msra.mxu0 0.0
    %132 = vmatprep.subr.mxu0 0.0
    %133 = vmatpush1.msra.mxu0 0.0
    %134 = vmatprep.subr.mxu0 0.0
    %135 = vmatpush1.msra.mxu0 0.0
    %136 = vmatprep.subr.mxu0 0.0
    %137 = vmatpush1.msra.mxu0 0.0
    %138 = vmatprep.subr.mxu0 0.0
    %139 = vmatpush1.msra.mxu0 0.0
    %140 = vmatprep.subr.mxu0 0.0
    %141 = vmatpush1.msra.mxu0 0.0
    %142 = vmatprep.subr.mxu0 0.0
    %143 = vmatpush1.msra.mxu0 0.0
    %144 = vmatprep.subr.mxu0 0.0
    %145 = vmatpush1.msra.mxu0 0.0
    %146 = vmatprep.subr.mxu0 0.0
    %147 = vmatpush1.msra.mxu0 0.0
    %148 = vmatprep.subr.mxu0 0.0
    %149 = vmatpush1.msra.mxu0 0.0
    %150 = vmatprep.subr.mxu0 0.0
    %151 = vmatpush1.msra.mxu0 0.0
    %152 = vmatprep.subr.mxu0 0.0
    %153 = vmatpush1.msra.mxu0 0.0
    %154 = vmatprep.subr.mxu0 0.0
    %155 = vmatpush1.msra.mxu0 0.0
    %156 = vmatprep.subr.mxu0 0.0
    %157 = vmatpush1.msra.mxu0 0.0
    %158 = vmatprep.subr.mxu0 0.0
    %159 = vmatpush1.msra.mxu0 0.0
    %160 = vmatprep.mubr.f32.mxu0 0.0
    %161 = vmatmul.mubr.f32.gmra.mrb[0].mxu0 %v94
    %v162 = vpop.f32.mrb[0].mxu0
    %v163 = vadd.f32 %v90, %v162
    %v164 = vpop.f32.mrb[0].mxu0
    %165 = vdwg.mxu0
    %166 = vst [vmem:[#allocation10] sm:$0xff] %v163
    %v167 = vld [vmem:[#allocation8] sm:$0xff]
    %v168 = vld [vmem:[#allocation8 + $0x8] sm:$0xff]
    %v169 = vld [vmem:[#allocation8 + $0x10] sm:$0xff]
    %v170 = vld [vmem:[#allocation8 + $0x18] sm:$0xff]
    %v171 = vld [vmem:[#allocation8 + $0x20] sm:$0xff]
    %v172 = vld [vmem:[#allocation8 + $0x28] sm:$0xff]
    %v173 = vld [vmem:[#allocation8 + $0x30] sm:$0xff]
    %v174 = vld [vmem:[#allocation8 + $0x38] sm:$0xff]
    %v175 = vld [vmem:[#allocation8 + $0x40] sm:$0xff]
    %v176 = vld [vmem:[#allocation8 + $0x48] sm:$0xff]
    %v177 = vld [vmem:[#allocation8 + $0x50] sm:$0xff]
    %v178 = vld [vmem:[#allocation8 + $0x58] sm:$0xff]
    %v179 = vld [vmem:[#allocation8 + $0x60] sm:$0xff]
    %v180 = vld [vmem:[#allocation8 + $0x68] sm:$0xff]
    %v181 = vld [vmem:[#allocation8 + $0x70] sm:$0xff]
    %v182 = vld [vmem:[#allocation8 + $0x78] sm:$0xff]
    %v183 = vld [vmem:[#allocation5] sm:$0xff]
    %v184 = vld [vmem:[%s5] sm:$0xff]
    %v185 = vld [vmem:[%s5 + $0x8] sm:$0xff]
    %vm186 = vcmask 130048
    %v188 = vsel %vm186, %v183, 0
    %190 = vmatprep.subr.mxu0 0.0
    %191 = vmatpush1.msra.mxu0 %v184
    %192 = vmatprep.subr.mxu0 0.0
    %193 = vmatpush1.msra.mxu0 %v185
    %194 = vmatprep.subr.mxu0 0.0
    %195 = vmatpush1.msra.mxu0 0.0
    %196 = vmatprep.subr.mxu0 0.0
    %197 = vmatpush1.msra.mxu0 0.0
    %198 = vmatprep.subr.mxu0 0.0
    %199 = vmatpush1.msra.mxu0 0.0
    %200 = vmatprep.subr.mxu0 0.0
    %201 = vmatpush1.msra.mxu0 0.0
    %202 = vmatprep.subr.mxu0 0.0
    %203 = vmatpush1.msra.mxu0 0.0
    %204 = vmatprep.subr.mxu0 0.0
    %205 = vmatpush1.msra.mxu0 0.0
    %206 = vmatprep.subr.mxu0 0.0
    %207 = vmatpush1.msra.mxu0 0.0
    %208 = vmatprep.subr.mxu0 0.0
    %209 = vmatpush1.msra.mxu0 0.0
    %210 = vmatprep.subr.mxu0 0.0
    %211 = vmatpush1.msra.mxu0 0.0
    %212 = vmatprep.subr.mxu0 0.0
    %213 = vmatpush1.msra.mxu0 0.0
    %214 = vmatprep.subr.mxu0 0.0
    %215 = vmatpush1.msra.mxu0 0.0
    %216 = vmatprep.subr.mxu0 0.0
    %217 = vmatpush1.msra.mxu0 0.0
    %218 = vmatprep.subr.mxu0 0.0
    %219 = vmatpush1.msra.mxu0 0.0
    %220 = vmatprep.subr.mxu0 0.0
    %221 = vmatpush1.msra.mxu0 0.0
    %222 = vmatprep.subr.mxu0 0.0
    %223 = vmatpush1.msra.mxu0 0.0
    %224 = vmatprep.subr.mxu0 0.0
    %225 = vmatpush1.msra.mxu0 0.0
    %226 = vmatprep.subr.mxu0 0.0
    %227 = vmatpush1.msra.mxu0 0.0
    %228 = vmatprep.subr.mxu0 0.0
    %229 = vmatpush1.msra.mxu0 0.0
    %230 = vmatprep.subr.mxu0 0.0
    %231 = vmatpush1.msra.mxu0 0.0
    %232 = vmatprep.subr.mxu0 0.0
    %233 = vmatpush1.msra.mxu0 0.0
    %234 = vmatprep.subr.mxu0 0.0
    %235 = vmatpush1.msra.mxu0 0.0
    %236 = vmatprep.subr.mxu0 0.0
    %237 = vmatpush1.msra.mxu0 0.0
    %238 = vmatprep.subr.mxu0 0.0
    %239 = vmatpush1.msra.mxu0 0.0
    %240 = vmatprep.subr.mxu0 0.0
    %241 = vmatpush1.msra.mxu0 0.0
    %242 = vmatprep.subr.mxu0 0.0
    %243 = vmatpush1.msra.mxu0 0.0
    %244 = vmatprep.subr.mxu0 0.0
    %245 = vmatpush1.msra.mxu0 0.0
    %246 = vmatprep.subr.mxu0 0.0
    %247 = vmatpush1.msra.mxu0 0.0
    %248 = vmatprep.subr.mxu0 0.0
    %249 = vmatpush1.msra.mxu0 0.0
    %250 = vmatprep.subr.mxu0 0.0
    %251 = vmatpush1.msra.mxu0 0.0
    %252 = vmatprep.subr.mxu0 0.0
    %253 = vmatpush1.msra.mxu0 0.0
    %254 = vmatprep.mubr.f32.mxu0 0.0
    %255 = vmatmul.mubr.f32.gmra.mrb[0].mxu0 %v188
    %v256 = vpop.f32.mrb[0].mxu0
    %v257 = vadd.f32 0.0, %v256
    %v258 = vpop.f32.mrb[0].mxu0
    %259 = vdwg.mxu0
    %260 = vmatprep.subr.mxu0 0.0
    %261 = vmatpush1.msra.mxu0 %v167
    %262 = vmatprep.subr.mxu0 0.0
    %263 = vmatpush1.msra.mxu0 %v168
    %264 = vmatprep.subr.mxu0 0.0
    %265 = vmatpush1.msra.mxu0 %v169
    %266 = vmatprep.subr.mxu0 0.0
    %267 = vmatpush1.msra.mxu0 %v170
    %268 = vmatprep.subr.mxu0 0.0
    %269 = vmatpush1.msra.mxu0 %v171
    %270 = vmatprep.subr.mxu0 0.0
    %271 = vmatpush1.msra.mxu0 %v172
    %272 = vmatprep.subr.mxu0 0.0
    %273 = vmatpush1.msra.mxu0 %v173
    %274 = vmatprep.subr.mxu0 0.0
    %275 = vmatpush1.msra.mxu0 %v174
    %276 = vmatprep.subr.mxu0 0.0
    %277 = vmatpush1.msra.mxu0 %v175
    %278 = vmatprep.subr.mxu0 0.0
    %279 = vmatpush1.msra.mxu0 %v176
    %280 = vmatprep.subr.mxu0 0.0
    %281 = vmatpush1.msra.mxu0 %v177
    %282 = vmatprep.subr.mxu0 0.0
    %283 = vmatpush1.msra.mxu0 %v178
    %284 = vmatprep.subr.mxu0 0.0
    %285 = vmatpush1.msra.mxu0 %v179
    %286 = vmatprep.subr.mxu0 0.0
    %287 = vmatpush1.msra.mxu0 %v180
    %288 = vmatprep.subr.mxu0 0.0
    %289 = vmatpush1.msra.mxu0 %v181
    %290 = vmatprep.subr.mxu0 0.0
    %291 = vmatpush1.msra.mxu0 %v182
    %292 = vmatprep.subr.mxu0 0.0
    %293 = vmatpush1.msra.mxu0 0.0
    %294 = vmatprep.subr.mxu0 0.0
    %295 = vmatpush1.msra.mxu0 0.0
    %296 = vmatprep.subr.mxu0 0.0
    %297 = vmatpush1.msra.mxu0 0.0
    %298 = vmatprep.subr.mxu0 0.0
    %299 = vmatpush1.msra.mxu0 0.0
    %300 = vmatprep.subr.mxu0 0.0
    %301 = vmatpush1.msra.mxu0 0.0
    %302 = vmatprep.subr.mxu0 0.0
    %303 = vmatpush1.msra.mxu0 0.0
    %304 = vmatprep.subr.mxu0 0.0
    %305 = vmatpush1.msra.mxu0 0.0
    %306 = vmatprep.subr.mxu0 0.0
    %307 = vmatpush1.msra.mxu0 0.0
    %308 = vmatprep.subr.mxu0 0.0
    %309 = vmatpush1.msra.mxu0 0.0
    %310 = vmatprep.subr.mxu0 0.0
    %311 = vmatpush1.msra.mxu0 0.0
    %312 = vmatprep.subr.mxu0 0.0
    %313 = vmatpush1.msra.mxu0 0.0
    %314 = vmatprep.subr.mxu0 0.0
    %315 = vmatpush1.msra.mxu0 0.0
    %316 = vmatprep.subr.mxu0 0.0
    %317 = vmatpush1.msra.mxu0 0.0
    %318 = vmatprep.subr.mxu0 0.0
    %319 = vmatpush1.msra.mxu0 0.0
    %320 = vmatprep.subr.mxu0 0.0
    %321 = vmatpush1.msra.mxu0 0.0
    %322 = vmatprep.subr.mxu0 0.0
    %323 = vmatpush1.msra.mxu0 0.0
    %324 = vmatprep.mubr.f32.mxu0 0.0
    %325 = vmatmul.mubr.f32.gmra.mrb[0].mxu0 %v163
    %v326 = vpop.f32.mrb[0].mxu0
    %v327 = vadd.f32 %v257, %v326
    %v328 = vpop.f32.mrb[0].mxu0
    %329 = vdwg.mxu0
    %v330 = vld [vmem:[%s6] sm:$0x1]
    %v332 = vlaneseq
    %v333 = vshrl.u32 %v332, 7
    %v334 = vsub.s32 0, %v333
    %v335 = vrot.slane %v330, %v334
    %v337 = vadd.f32 %v327, %v335
    %338 = vst [vmem:[%s8] sm:$0xff] %v337
    // Predicated region
    $region46: #{fused_encode_decode_aux.1} parent=1 // pred_check
      _
    $region47: #{fused_encode_decode_aux.1} parent=1 // pred_check_branch
      %340 = sbr.rel (0) target = $region49
    $region48: #{fused_encode_decode_aux.1} parent=1 // pred_region
      %s342 = ssub.s32 128, 128
      %343 = vsyncadd [#allocation4], %s342
      %s345 = sshll.u32 [#allocation10], 4
      %s346 = int_to_ptr.vmem [resolvable:$true] %s345
      %348 = dma.vmem_to_hbm [thread:$0]  %s346, 128, %s7, [#allocation4]
    $region49: #{fused_encode_decode_aux.1} parent=1 // pred_fallthru
      _
    // Predicated region
    $region50: #{fused_encode_decode_aux.1} parent=1 // pred_check
      _
    $region51: #{fused_encode_decode_aux.1} parent=1 // pred_check_branch
      %350 = sbr.rel (0) target = $region53
    $region52: #{fused_encode_decode_aux.1} parent=1 // pred_region
      _
    $region53: #{fused_encode_decode_aux.1} parent=1 // pred_fallthru
      _
    // Predicated region
    $region54: #{fused_encode_decode_aux.1} parent=1 // pred_check
      _
    $region55: #{fused_encode_decode_aux.1} parent=1 // pred_check_branch
      %352 = sbr.rel (0) target = $region57
    $region56: #{fused_encode_decode_aux.1} parent=1 // pred_region
      %353 = dma.done [#allocation4], 128
    $region57: #{fused_encode_decode_aux.1} parent=1 // pred_fallthru
      _
    // Predicated region
    $region58: #{fused_encode_decode_aux.1} parent=1 // pred_check
      _
    $region59: #{fused_encode_decode_aux.1} parent=1 // pred_check_branch
      %355 = sbr.rel (0) target = $region61
    $region60: #{fused_encode_decode_aux.1} parent=1 // pred_region
      _
    $region61: #{fused_encode_decode_aux.1} parent=1 // pred_fallthru
      _
    %356 = vsyncpa [#allocation3], 1
    %357 = vsyncpa [#allocation6], 1
    %358 = vsyncpa [#allocation9], 1
    %359 = vsyncpa [#allocation4], 1

</llo_original>
